<compile_context>
chip_gen: v6e
topology: v6e:2x2x1
jax: 0.10.0
libtpu: 0.0.40
codegen_flags: <defaults>
</compile_context>

<pallas_src>
import jax
import jax.numpy as jnp
from jax.experimental import pallas as pl
from jax.experimental.pallas import tpu as pltpu

EPS = 1e-5
NEG_SLOPE = 0.1


def _round_up(x, m):
    return (x + m - 1) // m * m


# ---------------- Pass 1: conv-as-GEMM (lane-dense) + per-tile BN partial stats ------
def conv_stats_kernel(w_ref, p_ref, y_ref, s_ref, ss_ref):
    # w_ref : (Cout_p, Kd_p)  bf16  -- weights, same block every grid step
    # p_ref : (Kd_p, BM)      bf16  -- im2col patches, transposed (Kd x M tile)
    # y_ref : (Cout_p, BM)    f32   -- conv output tile, M on the lane axis
    # s_ref / ss_ref : (1, Cout_p, 1) f32 -- per-tile partial sum / sum-of-squares
    y = jnp.dot(w_ref[...], p_ref[...], preferred_element_type=jnp.float32)
    y_ref[...] = y
    # Lane (XLU) reductions over M within the tile -> per-channel partials.
    s_ref[...] = jnp.sum(y, axis=1, keepdims=True)[None]
    ss_ref[...] = jnp.sum(y * y, axis=1, keepdims=True)[None]


# ---------------- Pass 2: BN affine (from global batch stats) + LeakyReLU ------------
def bn_lrelu_kernel(scale_ref, shift_ref, y_ref, o_ref):
    # scale/shift : (Cout_p, 1) f32, broadcast along lanes
    z = y_ref[...] * scale_ref[...] + shift_ref[...]
    o_ref[...] = jnp.where(z >= 0, z, NEG_SLOPE * z)


def _im2col_T_nchw(x, K, stride, padding, dilation):
    """Plain-JAX im2col producing the transposed layout [Kd, M] directly.

    Feature order along Kd: (cin, kh, kw) -- matches w.reshape(Cout, Cin*K*K).
    Row order along M: (n, ho, wo).
    """
    N, C, H, W = x.shape
    xp = jnp.pad(x, ((0, 0), (0, 0), (padding, padding), (padding, padding)))
    eff = (K - 1) * dilation + 1
    Ho = (H + 2 * padding - eff) // stride + 1
    Wo = (W + 2 * padding - eff) // stride + 1
    slices = []
    for kh in range(K):
        for kw in range(K):
            h0 = kh * dilation
            w0 = kw * dilation
            slices.append(
                xp[:, :,
                   h0:h0 + (Ho - 1) * stride + 1:stride,
                   w0:w0 + (Wo - 1) * stride + 1:stride])      # (N, C, Ho, Wo)
    cols = jnp.stack(slices, axis=0)                           # (K*K, N, C, Ho, Wo)
    patches_T = cols.transpose(2, 0, 1, 3, 4).reshape(C * K * K, N * Ho * Wo)
    return patches_T, Ho, Wo


def conv_bn_leakyrelu(x, w, b, gamma, beta, *, ksize, padding=0, stride=1,
                      dilation=1, block_m=256):
    """x: [N, Cin, H, W] (NCHW, matching PyTorch). Returns [N, Cout, Ho, Wo].

    block_m: M-tile (lane) size; use 1024-2048 for large layers on v5e/v6e,
    ~1024 on v7x (half the VMEM). 256 here keeps the small demo multi-tile.
    """
    del b  # conv bias is exactly cancelled by training-mode BN mean subtraction
    N, Cin, H, W = x.shape
    Cout = w.shape[0]
    K = ksize

    patches_T, Ho, Wo = _im2col_T_nchw(x, K, stride, padding, dilation)   # (Kd, M)
    Kd, M = patches_T.shape

    # Padding: Kd -> mult of 128 (fill MXU contraction), Cout -> mult of 8 (sublanes),
    # M -> mult of block_m (lane tiles). Zero padding does not perturb the GEMM or the
    # BN statistics (padded entries produce exact zeros).
    Kd_p = _round_up(Kd, 128)
    Cout_p = _round_up(Cout, 8)
    block_m = max(128, min(block_m, _round_up(M, 128)))
    M_p = _round_up(M, block_m)
    nt = M_p // block_m

    patches_T = jnp.pad(patches_T.astype(jnp.float32),
                        ((0, Kd_p - Kd), (0, M_p - M))).astype(jnp.bfloat16)
    w_T = jnp.pad(w.reshape(Cout, Cin * K * K).astype(jnp.float32),
                  ((0, Cout_p - Cout), (0, Kd_p - Kd))).astype(jnp.bfloat16)
    gamma_p = jnp.pad(gamma.astype(jnp.float32), (0, Cout_p - Cout),
                      constant_values=1.0)
    beta_p = jnp.pad(beta.astype(jnp.float32), (0, Cout_p - Cout))

    cparams = pltpu.CompilerParams(
        dimension_semantics=("parallel",),       # M tiles are independent (megacore)
        vmem_limit_bytes=32 * 1024 * 1024,       # safe on v7x's 64 MiB physical VMEM
    )

    # ---- Pass 1: yT = W @ patchesT (lane-dense (Cout, M)) + per-tile partial stats --
    y_T, psum, psumsq = pl.pallas_call(
        conv_stats_kernel,
        grid=(nt,),
        in_specs=[
            pl.BlockSpec((Cout_p, Kd_p), lambda i: (0, 0)),
            pl.BlockSpec((Kd_p, block_m), lambda i: (0, i)),
        ],
        out_specs=[
            pl.BlockSpec((Cout_p, block_m), lambda i: (0, i)),
            pl.BlockSpec((1, Cout_p, 1), lambda i: (i, 0, 0)),
            pl.BlockSpec((1, Cout_p, 1), lambda i: (i, 0, 0)),
        ],
        out_shape=[
            jax.ShapeDtypeStruct((Cout_p, M_p), jnp.float32),
            jax.ShapeDtypeStruct((nt, Cout_p, 1), jnp.float32),
            jax.ShapeDtypeStruct((nt, Cout_p, 1), jnp.float32),
        ],
        compiler_params=cparams,
    )(w_T, patches_T)

    # ---- Finalize global batch statistics (Cout-sized, negligible; plain JAX) -------
    # PyTorch BN (training) normalizes with biased variance over N*H*W = the true M.
    m_real = jnp.float32(M)
    mean = psum.sum(axis=0) / m_real                                  # (Cout_p, 1)
    var = jnp.maximum(psumsq.sum(axis=0) / m_real - mean * mean, 0.0)  # (Cout_p, 1)
    scale = gamma_p[:, None] * jax.lax.rsqrt(var + EPS)
    shift = beta_p[:, None] - mean * scale

    # ---- Pass 2: normalize + LeakyReLU, tiled over M ---------------------------------
    out_T = pl.pallas_call(
        bn_lrelu_kernel,
        grid=(nt,),
        in_specs=[
            pl.BlockSpec((Cout_p, 1), lambda i: (0, 0)),
            pl.BlockSpec((Cout_p, 1), lambda i: (0, 0)),
            pl.BlockSpec((Cout_p, block_m), lambda i: (0, i)),
        ],
        out_specs=pl.BlockSpec((Cout_p, block_m), lambda i: (0, i)),
        out_shape=jax.ShapeDtypeStruct((Cout_p, M_p), jnp.float32),
        compiler_params=cparams,
    )(scale, shift, y_T)

    # Strip padding and restore NCHW.
    out = out_T[:Cout, :M].reshape(Cout, N, Ho, Wo).transpose(1, 0, 2, 3)
    return out


def reference(x, w, b, gamma, beta, *, ksize, padding, stride, dilation):
    """Pure-JAX f32 reference of the PyTorch forward (training-mode BN)."""
    y = jax.lax.conv_general_dilated(
        x, w, window_strides=(stride, stride),
        padding=((padding, padding), (padding, padding)),
        rhs_dilation=(dilation, dilation),
        dimension_numbers=("NCHW", "OIHW", "NCHW"))
    y = y + b[None, :, None, None]
    mean = y.mean(axis=(0, 2, 3), keepdims=True)
    var = ((y - mean) ** 2).mean(axis=(0, 2, 3), keepdims=True)
    y_hat = (y - mean) / jnp.sqrt(var + EPS)
    z = gamma[None, :, None, None] * y_hat + beta[None, :, None, None]
    return jnp.where(z >= 0, z, NEG_SLOPE * z)


if __name__ == "__main__":
    # Module config: Conv_BN_LeakyReLU(in_channels=4, out_channels=8, ksize=3, padding=1)
    N, Cin, H, W = 2, 4, 16, 16
    Cout, K, pad, stride, dil = 8, 3, 1, 1, 1

    key = jax.random.PRNGKey(0)
    kx, kw, kb, kg, kbe = jax.random.split(key, 5)
    x = jax.random.normal(kx, (N, Cin, H, W), dtype=jnp.float32)
    w = jax.random.normal(kw, (Cout, Cin, K, K), dtype=jnp.float32) * 0.1
    b = jax.random.normal(kb, (Cout,), dtype=jnp.float32) * 0.1
    gamma = 1.0 + 0.1 * jax.random.normal(kg, (Cout,), dtype=jnp.float32)
    beta = 0.1 * jax.random.normal(kbe, (Cout,), dtype=jnp.float32)

    out = conv_bn_leakyrelu(x, w, b, gamma, beta,
                            ksize=K, padding=pad, stride=stride, dilation=dil,
                            block_m=256)
    out = jax.block_until_ready(out)

    ref = reference(x, w, b, gamma, beta,
                    ksize=K, padding=pad, stride=stride, dilation=dil)
    assert out.shape == ref.shape == (N, Cout, H, W)
    # Tolerance accounts for bf16 MXU inputs (f32 accumulation); BN renormalizes,
    # so the residual error is small.
    assert jnp.allclose(out, ref, atol=1e-2, rtol=1e-2), "mismatch vs JAX reference"

    print("KERNEL_OK")
</pallas_src>

<mosaic_0001>
module attributes {stable_mosaic.version = 11 : i64} {
  func.func @conv_stats_kernel(%arg0: i32, %arg1: memref<8x128xbf16, #tpu.memory_space<vmem>>, %arg2: memref<128x256xbf16, #tpu.memory_space<vmem>>, %arg3: memref<8x256xf32, #tpu.memory_space<vmem>>, %arg4: memref<1x8x1xf32, #tpu.memory_space<vmem>>, %arg5: memref<1x8x1xf32, #tpu.memory_space<vmem>>) attributes {dimension_semantics = [#tpu.dimension_semantics<parallel>], iteration_bounds = array<i64: 2>, scalar_prefetch = 0 : i64, scratch_operands = 0 : i64, tpu.core_type = #tpu.core_type<tc>, window_params = [{pipeline_mode = #tpu.pipeline_mode<synchronous>, transform_indices = @transform_0, window_bounds = array<i64: 8, 128>}, {transform_indices = @transform_1, window_bounds = array<i64: 128, 256>}, {transform_indices = @transform_2, window_bounds = array<i64: 8, 256>}, {transform_indices = @transform_3, window_bounds = array<i64: 1, 8, 1>}, {transform_indices = @transform_4, window_bounds = array<i64: 1, 8, 1>}]} {
    %c0 = arith.constant 0 : index
    %c0_0 = arith.constant 0 : index
    %0 = vector.load %arg1[%c0, %c0_0] : memref<8x128xbf16, #tpu.memory_space<vmem>>, vector<8x128xbf16>
    %c0_1 = arith.constant 0 : index
    %c0_2 = arith.constant 0 : index
    %1 = vector.load %arg2[%c0_1, %c0_2] : memref<128x256xbf16, #tpu.memory_space<vmem>>, vector<128x256xbf16>
    %cst = arith.constant dense<0.000000e+00> : vector<8x256xf32>
    %2 = tpu.matmul %0, %1, %cst {dimension_numbers = #tpu.dot_dimension_numbers<[1], [0], [0], [1], [0, 0, 1, 1], [], []>} : vector<8x128xbf16>, vector<128x256xbf16>, vector<8x256xf32> -> vector<8x256xf32>
    %c0_3 = arith.constant 0 : index
    %c0_4 = arith.constant 0 : index
    %3 = vector.load %arg3[%c0_3, %c0_4] : memref<8x256xf32, #tpu.memory_space<vmem>>, vector<8x256xf32>
    tpu.vector_store %arg3[%c0_3, %c0_4], %2 {strides = array<i32>} : memref<8x256xf32, #tpu.memory_space<vmem>>, vector<8x256xf32>,
    %cst_5 = arith.constant dense<0.000000e+00> : vector<8xf32>
    %4 = vector.multi_reduction <add>, %2, %cst_5 [1] : vector<8x256xf32> to vector<8xf32>
    %5 = vector.shape_cast %4 : vector<8xf32> to vector<8x1xf32>
    %6 = vector.shape_cast %5 : vector<8x1xf32> to vector<1x8x1xf32>
    %c0_6 = arith.constant 0 : index
    %c0_7 = arith.constant 0 : index
    %c0_8 = arith.constant 0 : index
    %7 = vector.load %arg4[%c0_6, %c0_7, %c0_8] : memref<1x8x1xf32, #tpu.memory_space<vmem>>, vector<1x8x1xf32>
    tpu.vector_store %arg4[%c0_6, %c0_7, %c0_8], %6 {strides = array<i32>} : memref<1x8x1xf32, #tpu.memory_space<vmem>>, vector<1x8x1xf32>,
    %8 = arith.mulf %2, %2 : vector<8x256xf32>
    %cst_9 = arith.constant dense<0.000000e+00> : vector<8xf32>
    %9 = vector.multi_reduction <add>, %8, %cst_9 [1] : vector<8x256xf32> to vector<8xf32>
    %10 = vector.shape_cast %9 : vector<8xf32> to vector<8x1xf32>
    %11 = vector.shape_cast %10 : vector<8x1xf32> to vector<1x8x1xf32>
    %c0_10 = arith.constant 0 : index
    %c0_11 = arith.constant 0 : index
    %c0_12 = arith.constant 0 : index
    %12 = vector.load %arg5[%c0_10, %c0_11, %c0_12] : memref<1x8x1xf32, #tpu.memory_space<vmem>>, vector<1x8x1xf32>
    tpu.vector_store %arg5[%c0_10, %c0_11, %c0_12], %11 {strides = array<i32>} : memref<1x8x1xf32, #tpu.memory_space<vmem>>, vector<1x8x1xf32>,
    return
  }
  func.func @transform_0(%arg0: i32) -> (i32, i32) {
    %c0_i32 = arith.constant 0 : i32
    %c0_i32_0 = arith.constant 0 : i32
    %c0_i32_1 = arith.constant 0 : i32
    return %c0_i32, %c0_i32_0 : i32, i32
  }
  func.func @transform_1(%arg0: i32) -> (i32, i32) {
    %c0_i32 = arith.constant 0 : i32
    %c0_i32_0 = arith.constant 0 : i32
    return %c0_i32, %arg0 : i32, i32
  }
  func.func @transform_2(%arg0: i32) -> (i32, i32) {
    %c0_i32 = arith.constant 0 : i32
    %c0_i32_0 = arith.constant 0 : i32
    return %c0_i32, %arg0 : i32, i32
  }
  func.func @transform_3(%arg0: i32) -> (i32, i32, i32) {
    %c0_i32 = arith.constant 0 : i32
    %c0_i32_0 = arith.constant 0 : i32
    %c0_i32_1 = arith.constant 0 : i32
    return %arg0, %c0_i32, %c0_i32_0 : i32, i32, i32
  }
  func.func @transform_4(%arg0: i32) -> (i32, i32, i32) {
    %c0_i32 = arith.constant 0 : i32
    %c0_i32_0 = arith.constant 0 : i32
    %c0_i32_1 = arith.constant 0 : i32
    return %arg0, %c0_i32, %c0_i32_0 : i32, i32, i32
  }
}

</mosaic_0001>

<llo_original>
// kernel: tpu_custom_call.1
$region0: #{tpu_custom_call.1}
  #allocation0 [shape = 'u32[]', space=smem, size = 0x4, offset = 0x4, fixed_abs, tag = 'smem constant byte address 0x4 - core index']
  #allocation1 [shape = 'u32[144,128]{1,0:T(1,128)}', space=vmem, size = 0x12000, scoped, tag = 'internal scratch']
  %s0 = inlined_call_operand.hbm [shape: bf16[8,128], index: 0, kind: input, shape index: {}]
  %s1 = inlined_call_operand.hbm [shape: bf16[128,512], index: 1, kind: input, shape index: {}]
  %s2 = inlined_call_operand.hbm [shape: f32[8,512], index: 2, kind: output, shape index: {0}]
  %s3 = inlined_call_operand.vmem [shape: f32[2,8,1], index: 3, kind: output, shape index: {1}]
  %s4 = inlined_call_operand.vmem [shape: f32[2,8,1], index: 4, kind: output, shape index: {2}]
  %5 = xla_tuple %s2, %s3, %s4
  %s6 = sld [smem:[#allocation0]]
  $region65: #{tpu_custom_call.1} parent=0
    _
  %s8 = ssub.s32 1, %s6
  %s9 = scalar_select 0, %s8, %s6
  $region1: #{tpu_custom_call.1} parent=0
    #allocation2 [shape = 'u8[2048]{0}', space=vmem, size = 0x800, scoped, tag = 'input window, operand 0, single buffered']
    #allocation3 [shape = 's32[2]{0}', space=sflag, size = 0x8, scoped, tag = 'scoped memory for tpu_custom_call.1']
    #allocation4 [shape = 's32[2]{0}', space=sflag, size = 0x8, scoped, tag = 'scoped memory for tpu_custom_call.1']
    #allocation5 [shape = 'u8[131072]{0}', space=vmem, size = 0x20000, scoped, tag = 'input window, operand 1']
    #allocation6 [shape = 's32[2]{0}', space=sflag, size = 0x8, scoped, tag = 'scoped memory for tpu_custom_call.1']
    #allocation7 [shape = 'u8[16384]{0}', space=vmem, size = 0x4000, scoped, tag = 'output window, operand 0']
    %10 = vsyncpa [#allocation3], 0
    %11 = vsyncpa [#allocation6], 0
    %s12 = scalar_lea.sflag [#allocation6], 1
    %13 = vsyncpa %s12, 0
    %14 = vsyncpa [#allocation4], 0
    %s15 = scalar_lea.sflag [#allocation4], 1
    %16 = vsyncpa %s15, 0
    loop: start=0, step=1, limit=4
    $region2: #{tpu_custom_call.1} parent=1 // loop_pre_header
      _
    $region3: #{tpu_custom_call.1} parent=1 // loop_header
      %s18 = sphi 0, %s22
      %p19 = scmp.ge.s32.totalorder %s18, 4
      %s26 = sphi 0, %s26
      %s28 = sphi 0, %s26
      %s29 = sphi 0, %s28
      %s43 = sphi 0, %s29
      %s49 = sphi 0, %s51
      %s52 = sphi 0, %s49
      %s53 = sphi 0, %s52
      %s69 = sphi 0, %s53
      %s75 = sphi 0, %s77
      %s78 = sphi 0, %s75
      %s79 = sphi 0, %s78
      %s95 = sphi 0, %s79
      %s101 = sphi 0, %s103
      %s104 = sphi 0, %s101
      %s105 = sphi 0, %s104
      %s121 = sphi 0, %s105
      %s127 = sphi 0, %s129
      %s130 = sphi 0, %s127
      %s131 = sphi 0, %s130
      %s147 = sphi 0, %s131
    $region4: #{tpu_custom_call.1} parent=1 // loop_header_branch
      %21 = sbr.rel (%p19) target = $region8
    $region5: #{tpu_custom_call.1} parent=1 // loop_body
      %s23 = ssub.s32 %s18, 1
      %s24 = ssub.s32 %s18, 2
      %s25 = sadd.s32 %s18, 1
      %s27 = sadd.s32 %s26, 1
      %p30 = scmp.eq.s32.totalorder %s18, 1
      %p31 = scmp.ne.s32.totalorder %s26, %s28
      %p32 = scmp.eq.s32.totalorder %s18, 0
      %p33 = por %p31, %p32
      %p34 = scmp.ne.s32.totalorder %s26, %s28
      %p35 = scmp.eq.s32.totalorder %s23, 1
      %p36 = por %p34, %p35
      %p37 = scmp.ne.s32.totalorder %s28, %s29
      %p38 = scmp.eq.s32.totalorder %s23, 0
      %p39 = por %p37, %p38
      %p40 = scmp.ne.s32.totalorder %s28, %s29
      %p41 = scmp.eq.s32.totalorder %s24, 1
      %p42 = por %p40, %p41
      %p44 = scmp.ne.s32.totalorder %s29, %s43
      %p45 = scmp.eq.s32.totalorder %s24, 0
      %p46 = por %p44, %p45
      %s47 = ssub.s32 %s18, %s25
      %p48 = scmp.eq.s32.totalorder %s47, 0
      %s50 = sadd.s32 %s49, 1
      %s51 = scalar_select %p48, %s49, %s50
      %p54 = pneg %p48
      %p55 = scmp.eq.s32.totalorder %s18, 1
      %p56 = por %p54, %p55
      %p57 = scmp.ne.s32.totalorder %s49, %s52
      %p58 = scmp.eq.s32.totalorder %s18, 0
      %p59 = por %p57, %p58
      %p60 = scmp.ne.s32.totalorder %s49, %s52
      %p61 = scmp.eq.s32.totalorder %s23, 1
      %p62 = por %p60, %p61
      %p63 = scmp.ne.s32.totalorder %s52, %s53
      %p64 = scmp.eq.s32.totalorder %s23, 0
      %p65 = por %p63, %p64
      %p66 = scmp.ne.s32.totalorder %s52, %s53
      %p67 = scmp.eq.s32.totalorder %s24, 1
      %p68 = por %p66, %p67
      %p70 = scmp.ne.s32.totalorder %s53, %s69
      %p71 = scmp.eq.s32.totalorder %s24, 0
      %p72 = por %p70, %p71
      %s73 = ssub.s32 %s18, %s25
      %p74 = scmp.eq.s32.totalorder %s73, 0
      %s76 = sadd.s32 %s75, 1
      %s77 = scalar_select %p74, %s75, %s76
      %p80 = pneg %p74
      %p81 = scmp.eq.s32.totalorder %s18, 1
      %p82 = por %p80, %p81
      %p83 = scmp.ne.s32.totalorder %s75, %s78
      %p84 = scmp.eq.s32.totalorder %s18, 0
      %p85 = por %p83, %p84
      %p86 = scmp.ne.s32.totalorder %s75, %s78
      %p87 = scmp.eq.s32.totalorder %s23, 1
      %p88 = por %p86, %p87
      %p89 = scmp.ne.s32.totalorder %s78, %s79
      %p90 = scmp.eq.s32.totalorder %s23, 0
      %p91 = por %p89, %p90
      %p92 = scmp.ne.s32.totalorder %s78, %s79
      %p93 = scmp.eq.s32.totalorder %s24, 1
      %p94 = por %p92, %p93
      %p96 = scmp.ne.s32.totalorder %s79, %s95
      %p97 = scmp.eq.s32.totalorder %s24, 0
      %p98 = por %p96, %p97
      %s99 = ssub.s32 %s18, %s25
      %p100 = scmp.eq.s32.totalorder %s99, 0
      %s102 = sadd.s32 %s101, 1
      %s103 = scalar_select %p100, %s101, %s102
      %p106 = pneg %p100
      %p107 = scmp.eq.s32.totalorder %s18, 1
      %p108 = por %p106, %p107
      %p109 = scmp.ne.s32.totalorder %s101, %s104
      %p110 = scmp.eq.s32.totalorder %s18, 0
      %p111 = por %p109, %p110
      %p112 = scmp.ne.s32.totalorder %s101, %s104
      %p113 = scmp.eq.s32.totalorder %s23, 1
      %p114 = por %p112, %p113
      %p115 = scmp.ne.s32.totalorder %s104, %s105
      %p116 = scmp.eq.s32.totalorder %s23, 0
      %p117 = por %p115, %p116
      %p118 = scmp.ne.s32.totalorder %s104, %s105
      %p119 = scmp.eq.s32.totalorder %s24, 1
      %p120 = por %p118, %p119
      %p122 = scmp.ne.s32.totalorder %s105, %s121
      %p123 = scmp.eq.s32.totalorder %s24, 0
      %p124 = por %p122, %p123
      %s125 = ssub.s32 %s18, %s25
      %p126 = scmp.eq.s32.totalorder %s125, 0
      %s128 = sadd.s32 %s127, 1
      %s129 = scalar_select %p126, %s127, %s128
      %p132 = pneg %p126
      %p133 = scmp.eq.s32.totalorder %s18, 1
      %p134 = por %p132, %p133
      %p135 = scmp.ne.s32.totalorder %s127, %s130
      %p136 = scmp.eq.s32.totalorder %s18, 0
      %p137 = por %p135, %p136
      %p138 = scmp.ne.s32.totalorder %s127, %s130
      %p139 = scmp.eq.s32.totalorder %s23, 1
      %p140 = por %p138, %p139
      %p141 = scmp.ne.s32.totalorder %s130, %s131
      %p142 = scmp.eq.s32.totalorder %s23, 0
      %p143 = por %p141, %p142
      %p144 = scmp.ne.s32.totalorder %s130, %s131
      %p145 = scmp.eq.s32.totalorder %s24, 1
      %p146 = por %p144, %p145
      %p148 = scmp.ne.s32.totalorder %s131, %s147
      %p149 = scmp.eq.s32.totalorder %s24, 0
      %p150 = por %p148, %p149
      %p151 = scmp.le.s32.totalorder 1, %s18
      %p152 = scmp.lt.s32.totalorder %s18, 3
      %p153 = pnand %p151, %p152
      %p154 = pneg %p153
      // Predicated region
      $region9: #{tpu_custom_call.1} parent=5 // pred_check
        _
      $region10: #{tpu_custom_call.1} parent=5 // pred_check_branch
        %156 = sbr.rel (%p153) target = $region12
      $region11: #{tpu_custom_call.1} parent=5 // pred_region
        %s157 = ssub.s32 %s18, 1
        // Predicated region
        $region13: #{tpu_custom_call.1} parent=11 // pred_check
          %p158 = pneg %p39
        $region14: #{tpu_custom_call.1} parent=11 // pred_check_branch
          %160 = sbr.rel (%p158) target = $region16
        $region15: #{tpu_custom_call.1} parent=11 // pred_region
          %s162 = ssub.s32 64, 64
          %163 = vsyncadd [#allocation3], %s162
          %s165 = sshll.u32 [#allocation2], 4
          %s166 = int_to_ptr.vmem [resolvable:$true] %s165
          %168 = dma.hbm_to_vmem [thread:$0]  %s0, 64, %s166, [#allocation3]
        $region16: #{tpu_custom_call.1} parent=11 // pred_fallthru
          _
      $region12: #{tpu_custom_call.1} parent=5 // pred_fallthru
        _
      %p169 = scmp.lt.s32.totalorder %s18, 2
      // Predicated region
      $region17: #{tpu_custom_call.1} parent=5 // pred_check
        %p170 = pneg %p169
      $region18: #{tpu_custom_call.1} parent=5 // pred_check_branch
        %172 = sbr.rel (%p170) target = $region20
      $region19: #{tpu_custom_call.1} parent=5 // pred_region
        // Predicated region
        $region21: #{tpu_custom_call.1} parent=19 // pred_check
          %p173 = pneg %p59
        $region22: #{tpu_custom_call.1} parent=19 // pred_check_branch
          %175 = sbr.rel (%p173) target = $region24
        $region23: #{tpu_custom_call.1} parent=19 // pred_region
          %s176 = sand.u32 %s49, 1
          %s177 = scalar_lea.sflag [#allocation6], %s176
          %s178 = sand.u32 %s49, 1
          %s179 = smul.addr %s178, 128
          %s180 = scalar_lea.vmem [#allocation5], %s179
          %s181 = smul.u32 2, %s18
          %s183 = ssub.s32 2048, 2048
          %184 = vsyncadd %s177, %s183
          %s185 = smul.addr %s181, 64
          %s186 = scalar_lea.hbm %s1, %s185
          %s187 = sshll.u32 %s180, 4
          %s188 = int_to_ptr.vmem [resolvable:$true] %s187
          %193 = dma.hbm_to_vmem [thread:$0]  %s186, 2048, %s188, %s177, 256, 128, 8
        $region24: #{tpu_custom_call.1} parent=19 // pred_fallthru
          _
      $region20: #{tpu_custom_call.1} parent=5 // pred_fallthru
        _
      %p194 = scmp.le.s32.totalorder 1, %s18
      %p195 = scmp.lt.s32.totalorder %s18, 3
      %p196 = pnand %p194, %p195
      %p197 = pneg %p196
      // Predicated region
      $region25: #{tpu_custom_call.1} parent=5 // pred_check
        _
      $region26: #{tpu_custom_call.1} parent=5 // pred_check_branch
        %199 = sbr.rel (%p196) target = $region28
      $region27: #{tpu_custom_call.1} parent=5 // pred_region
        %s200 = ssub.s32 %s18, 1
        // Predicated region
        $region29: #{tpu_custom_call.1} parent=27 // pred_check
          %p201 = pneg %p39
        $region30: #{tpu_custom_call.1} parent=27 // pred_check_branch
          %203 = sbr.rel (%p201) target = $region32
        $region31: #{tpu_custom_call.1} parent=27 // pred_region
          %204 = dma.done [#allocation3], 64
        $region32: #{tpu_custom_call.1} parent=27 // pred_fallthru
          _
        %s205 = sand.u32 %s52, 1
        %s206 = scalar_lea.sflag [#allocation6], %s205
        %s207 = sand.u32 %s52, 1
        %s208 = smul.addr %s207, 128
        %s209 = scalar_lea.vmem [#allocation5], %s208
        // Predicated region
        $region33: #{tpu_custom_call.1} parent=27 // pred_check
          %p210 = pneg %p65
        $region34: #{tpu_custom_call.1} parent=27 // pred_check_branch
          %212 = sbr.rel (%p210) target = $region36
        $region35: #{tpu_custom_call.1} parent=27 // pred_region
          %213 = dma.done %s206, 2048
        $region36: #{tpu_custom_call.1} parent=27 // pred_fallthru
          _
        %p214 = pneg %p39
        %p215 = pneg %p36
        %s216 = sand.u32 %s52, 1
        %s217 = scalar_lea.sflag [#allocation6], %s216
        %s218 = sand.u32 %s52, 1
        %s219 = smul.addr %s218, 128
        %s220 = scalar_lea.vmem [#allocation5], %s219
        %p221 = pneg %p65
        %p222 = pneg %p62
        %p223 = pneg %p91
        %p224 = pneg %p88
        %s225 = sand.u32 %s78, 1
        %s226 = scalar_lea.sflag [#allocation4], %s225
        %s227 = sand.u32 %s78, 1
        %s228 = smul.addr %s227, 16
        %s229 = scalar_lea.vmem [#allocation7], %s228
        %p230 = pneg %p117
        %p231 = pneg %p114
        %p232 = scmp.lt.s32.totalorder %s23, 1
        %s233 = scalar_select %p232, %s23, 1
        %s234 = smul.addr %s233, 8
        %s235 = scalar_lea.vmem %s3, %s234
        %p236 = pneg %p143
        %p237 = pneg %p140
        %p238 = scmp.lt.s32.totalorder %s23, 1
        %s239 = scalar_select %p238, %s23, 1
        %s240 = smul.addr %s239, 8
        %s241 = scalar_lea.vmem %s4, %s240
        %s242 = smul.u32 2, %s23
        %s243 = smul.u32 2, %s23
        %p244 = scmp.lt.s32.totalorder %s23, 1
        %s245 = scalar_select %p244, %s23, 1
        %s246 = smul.addr %s245, 8
        %s247 = scalar_lea.vmem %s3, %s246
        %p248 = scmp.lt.s32.totalorder %s23, 1
        %s249 = scalar_select %p248, %s23, 1
        %s250 = smul.addr %s249, 8
        %s251 = scalar_lea.vmem %s4, %s250
        %v253 = vld [vmem:[#allocation2] sm:$0xf]
        %v254 = vld [vmem:[%s209] sm:$0xff]
        %v255 = vld [vmem:[%s209 + $0x8] sm:$0xff]
        %v256 = vld [vmem:[%s209 + $0x10] sm:$0xff]
        %v257 = vld [vmem:[%s209 + $0x18] sm:$0xff]
        %v258 = vld [vmem:[%s209 + $0x20] sm:$0xff]
        %v259 = vld [vmem:[%s209 + $0x28] sm:$0xff]
        %v260 = vld [vmem:[%s209 + $0x30] sm:$0xff]
        %v261 = vld [vmem:[%s209 + $0x38] sm:$0xff]
        %v262 = vld [vmem:[%s209 + $0x40] sm:$0xff]
        %v263 = vld [vmem:[%s209 + $0x48] sm:$0xff]
        %v264 = vld [vmem:[%s209 + $0x50] sm:$0xff]
        %v265 = vld [vmem:[%s209 + $0x58] sm:$0xff]
        %v266 = vld [vmem:[%s209 + $0x60] sm:$0xff]
        %v267 = vld [vmem:[%s209 + $0x68] sm:$0xff]
        %v268 = vld [vmem:[%s209 + $0x70] sm:$0xff]
        %v269 = vld [vmem:[%s209 + $0x78] sm:$0xff]
        %v286 = vunpack.c.l.b16 %v254
        %v287 = vunpack.c.h.b16 %v254
        %v288 = vunpack.c.l.b16 %v255
        %v289 = vunpack.c.h.b16 %v255
        %v290 = vunpack.c.l.b16 %v256
        %v291 = vunpack.c.h.b16 %v256
        %v292 = vunpack.c.l.b16 %v257
        %v293 = vunpack.c.h.b16 %v257
        %v294 = vunpack.c.l.b16 %v258
        %v295 = vunpack.c.h.b16 %v258
        %v296 = vunpack.c.l.b16 %v259
        %v297 = vunpack.c.h.b16 %v259
        %v298 = vunpack.c.l.b16 %v260
        %v299 = vunpack.c.h.b16 %v260
        %v300 = vunpack.c.l.b16 %v261
        %v301 = vunpack.c.h.b16 %v261
        %v302 = vunpack.c.l.b16 %v262
        %v303 = vunpack.c.h.b16 %v262
        %v304 = vunpack.c.l.b16 %v263
        %v305 = vunpack.c.h.b16 %v263
        %v306 = vunpack.c.l.b16 %v264
        %v307 = vunpack.c.h.b16 %v264
        %v308 = vunpack.c.l.b16 %v265
        %v309 = vunpack.c.h.b16 %v265
        %v310 = vunpack.c.l.b16 %v266
        %v311 = vunpack.c.h.b16 %v266
        %v312 = vunpack.c.l.b16 %v267
        %v313 = vunpack.c.h.b16 %v267
        %v314 = vunpack.c.l.b16 %v268
        %v315 = vunpack.c.h.b16 %v268
        %v316 = vunpack.c.l.b16 %v269
        %v317 = vunpack.c.h.b16 %v269
        %v318 = vpack.c.b16 %v288, %v286
        %v319 = vpack.c.b16 %v289, %v287
        %v320 = vpack.c.b16 %v292, %v290
        %v321 = vpack.c.b16 %v293, %v291
        %v322 = vpack.c.b16 %v296, %v294
        %v323 = vpack.c.b16 %v297, %v295
        %v324 = vpack.c.b16 %v300, %v298
        %v325 = vpack.c.b16 %v301, %v299
        %v326 = vpack.c.b16 %v304, %v302
        %v327 = vpack.c.b16 %v305, %v303
        %v328 = vpack.c.b16 %v308, %v306
        %v329 = vpack.c.b16 %v309, %v307
        %v330 = vpack.c.b16 %v312, %v310
        %v331 = vpack.c.b16 %v313, %v311
        %v332 = vpack.c.b16 %v316, %v314
        %v333 = vpack.c.b16 %v317, %v315
        %350 = vmatprep.subr.bf16.mxu0 %v333
        %351 = vmatpush1.bf16.msra.mxu0 %v332
        %352 = vmatprep.subr.bf16.mxu0 %v331
        %353 = vmatpush1.bf16.msra.mxu0 %v330
        %354 = vmatprep.subr.bf16.mxu0 %v329
        %355 = vmatpush1.bf16.msra.mxu0 %v328
        %356 = vmatprep.subr.bf16.mxu0 %v327
        %357 = vmatpush1.bf16.msra.mxu0 %v326
        %358 = vmatprep.subr.bf16.mxu0 %v325
        %359 = vmatpush1.bf16.msra.mxu0 %v324
        %360 = vmatprep.subr.bf16.mxu0 %v323
        %361 = vmatpush1.bf16.msra.mxu0 %v322
        %362 = vmatprep.subr.bf16.mxu0 %v321
        %363 = vmatpush1.bf16.msra.mxu0 %v320
        %364 = vmatprep.subr.bf16.mxu0 %v319
        %365 = vmatpush1.bf16.msra.mxu0 %v318
        %366 = vmatprep.subr.bf16.mxu0 0
        %367 = vmatpush2.bf16.msra.mxu0 0
        %368 = vmatprep.subr.bf16.mxu0 0
        %369 = vmatpush2.bf16.msra.mxu0 0
        %370 = vmatprep.subr.bf16.mxu0 0
        %371 = vmatpush2.bf16.msra.mxu0 0
        %372 = vmatprep.subr.bf16.mxu0 0
        %373 = vmatpush2.bf16.msra.mxu0 0
        %374 = vmatprep.subr.bf16.mxu0 0
        %375 = vmatpush2.bf16.msra.mxu0 0
        %376 = vmatprep.subr.bf16.mxu0 0
        %377 = vmatpush2.bf16.msra.mxu0 0
        %378 = vmatprep.subr.bf16.mxu0 0
        %379 = vmatpush2.bf16.msra.mxu0 0
        %380 = vmatprep.subr.bf16.mxu0 0
        %381 = vmatpush2.bf16.msra.mxu0 0
        %382 = vmatprep.mubr.bf16.mxu0 0
        %383 = vmatmul.mubr.bf16.gmra.mxu0 %v253
        %v384 = vpop.f32.mrf.mxu0
        %v385 = vadd.f32 0.0, %v384
        %v386 = vpop.f32.mrf.mxu0
        %v387 = vadd.f32 0.0, %v386
        %v388 = vpop.f32.mrf.mxu0
        %v389 = vpop.f32.mrf.mxu0
        %390 = vdwg.mxu0
        %391 = vst [vmem:[%s229] sm:$0xff] %v385
        %392 = vst [vmem:[%s229 + $0x8] sm:$0xff] %v387
        %v393 = vadd.f32 %v385, %v387
        %394 = vadd.xlane.f32.xlu0 %v393
        %v395 = vpop.xlane.xlu0 %394
        %vm396 = vcmask 7168
        %397 = vst.msk [vmem:[%s247] sm:$0xff] %vm396, %v395
        %v398 = vmul.f32 %v385, %v385
        %v399 = vmul.f32 %v387, %v387
        %v400 = vadd.f32 %v398, %v399
        %401 = vadd.xlane.f32.xlu0 %v400
        %v402 = vpop.xlane.xlu0 %401
        %403 = vst.msk [vmem:[%s251] sm:$0xff] %vm396, %v402
        %s404 = sand.u32 %s78, 1
        %s405 = scalar_lea.sflag [#allocation4], %s404
        %s406 = sand.u32 %s78, 1
        %s407 = smul.addr %s406, 16
        %s408 = scalar_lea.vmem [#allocation7], %s407
        %p409 = scmp.lt.s32.totalorder %s23, 1
        %s410 = scalar_select %p409, %s23, 1
        %s411 = smul.addr %s410, 8
        %s412 = scalar_lea.vmem %s3, %s411
        %p413 = scmp.lt.s32.totalorder %s23, 1
        %s414 = scalar_select %p413, %s23, 1
        %s415 = smul.addr %s414, 8
        %s416 = scalar_lea.vmem %s4, %s415
        // Predicated region
        $region37: #{tpu_custom_call.1} parent=27 // pred_check
          %p417 = pneg %p88
        $region38: #{tpu_custom_call.1} parent=27 // pred_check_branch
          %419 = sbr.rel (%p417) target = $region40
        $region39: #{tpu_custom_call.1} parent=27 // pred_region
          %s420 = smul.u32 2, %s23
          %s422 = ssub.s32 256, 256
          %423 = vsyncadd %s405, %s422
          %s424 = smul.addr %s420, 128
          %s425 = scalar_lea.hbm %s2, %s424
          %s427 = sshll.u32 %s408, 4
          %s428 = int_to_ptr.vmem [resolvable:$true] %s427
          %430 = dma.vmem_to_hbm [thread:$0]  %s428, 256, %s425, %s405
        $region40: #{tpu_custom_call.1} parent=27 // pred_fallthru
          _
        // Predicated region
        $region41: #{tpu_custom_call.1} parent=27 // pred_check
          %p431 = pneg %p114
        $region42: #{tpu_custom_call.1} parent=27 // pred_check_branch
          %433 = sbr.rel (%p431) target = $region44
        $region43: #{tpu_custom_call.1} parent=27 // pred_region
          _
        $region44: #{tpu_custom_call.1} parent=27 // pred_fallthru
          _
        // Predicated region
        $region45: #{tpu_custom_call.1} parent=27 // pred_check
          %p434 = pneg %p140
        $region46: #{tpu_custom_call.1} parent=27 // pred_check_branch
          %436 = sbr.rel (%p434) target = $region48
        $region47: #{tpu_custom_call.1} parent=27 // pred_region
          _
        $region48: #{tpu_custom_call.1} parent=27 // pred_fallthru
          _
      $region28: #{tpu_custom_call.1} parent=5 // pred_fallthru
        _
      %p437 = scmp.le.s32.totalorder 2, %s18
      // Predicated region
      $region49: #{tpu_custom_call.1} parent=5 // pred_check
        %p438 = pneg %p437
      $region50: #{tpu_custom_call.1} parent=5 // pred_check_branch
        %440 = sbr.rel (%p438) target = $region52
      $region51: #{tpu_custom_call.1} parent=5 // pred_region
        %s441 = ssub.s32 %s18, 2
        // Predicated region
        $region53: #{tpu_custom_call.1} parent=51 // pred_check
          %p442 = pneg %p94
        $region54: #{tpu_custom_call.1} parent=51 // pred_check_branch
          %444 = sbr.rel (%p442) target = $region56
        $region55: #{tpu_custom_call.1} parent=51 // pred_region
          %s445 = sand.u32 %s79, 1
          %s446 = scalar_lea.sflag [#allocation4], %s445
          %s447 = sand.u32 %s79, 1
          %s448 = smul.addr %s447, 16
          %s449 = scalar_lea.vmem [#allocation7], %s448
          %450 = dma.done %s446, 256
        $region56: #{tpu_custom_call.1} parent=51 // pred_fallthru
          _
        // Predicated region
        $region57: #{tpu_custom_call.1} parent=51 // pred_check
          %p451 = pneg %p120
        $region58: #{tpu_custom_call.1} parent=51 // pred_check_branch
          %453 = sbr.rel (%p451) target = $region60
        $region59: #{tpu_custom_call.1} parent=51 // pred_region
          %p454 = scmp.lt.s32.totalorder %s24, 1
          %s455 = scalar_select %p454, %s24, 1
          %s456 = smul.addr %s455, 8
          %s457 = scalar_lea.vmem %s3, %s456
        $region60: #{tpu_custom_call.1} parent=51 // pred_fallthru
          _
        // Predicated region
        $region61: #{tpu_custom_call.1} parent=51 // pred_check
          %p458 = pneg %p146
        $region62: #{tpu_custom_call.1} parent=51 // pred_check_branch
          %460 = sbr.rel (%p458) target = $region64
        $region63: #{tpu_custom_call.1} parent=51 // pred_region
          %p461 = scmp.lt.s32.totalorder %s24, 1
          %s462 = scalar_select %p461, %s24, 1
          %s463 = smul.addr %s462, 8
          %s464 = scalar_lea.vmem %s4, %s463
        $region64: #{tpu_custom_call.1} parent=51 // pred_fallthru
          _
      $region52: #{tpu_custom_call.1} parent=5 // pred_fallthru
        _
    $region6: #{tpu_custom_call.1} parent=1 // loop_footer
      %s22 = sadd.s32 1, %s18
    $region7: #{tpu_custom_call.1} parent=1 // loop_footer_branch
      %17 = sbr.rel target = $region3
    $region8: #{tpu_custom_call.1} parent=1 // loop_exit
      _
    %465 = vsyncpa [#allocation3], 1
    %s466 = scalar_lea.sflag [#allocation3], 1
    %467 = vsyncpa %s466, 1
    %468 = vsyncpa [#allocation6], 1
    %s469 = scalar_lea.sflag [#allocation6], 1
    %470 = vsyncpa %s469, 1
    %471 = vsyncpa [#allocation4], 1
    %s472 = scalar_lea.sflag [#allocation4], 1
    %473 = vsyncpa %s472, 1

</llo_original>
